<compile_context>
chip_gen: v7x
topology: tpu7x:2x2x1
jax: 0.10.0
libtpu: 0.0.40
codegen_flags: <defaults>
</compile_context>

<pallas_src>
import jax
import jax.numpy as jnp
from jax import lax
from jax.experimental import pallas as pl
from jax.experimental.pallas import tpu as pltpu


def _round_up(x, m):
    return ((x + m - 1) // m) * m


def _vmem_limit_bytes():
    """Generation-aware scoped-VMEM limit (leave headroom for Mosaic scratch)."""
    try:
        info = pltpu.get_tpu_info()
        cap = getattr(info, "vmem_capacity_bytes", 128 * 1024 * 1024)
    except Exception:
        cap = 128 * 1024 * 1024
    # 3/4 of physical, capped at 100 MiB, never below the 32 MiB default.
    return max(32 * 1024 * 1024, min((cap * 3) // 4, 100 * 1024 * 1024))


def hugmodel_kernel(feat_ref, w_ref, b_ref, lab_ref, logits_ref, loss_ref):
    # --- net.forward(features): Linear layer on the MXU (bf16 in, f32 acc) ---
    # Features arrive as f32 straight from HBM; cast to bf16 here (VPU filler
    # hidden under the DMA/MXU) instead of paying a wrapper-side pad+cast pass.
    x = feat_ref[...].astype(jnp.bfloat16)               # (TB, D)     bf16
    w = w_ref[...]                                        # (C_pad, D)  bf16 resident
    # x @ w.T without materializing a transpose: contract dim 1 with dim 1.
    logits = lax.dot_general(
        x, w, dimension_numbers=(((1,), (1,)), ((), ())),
        preferred_element_type=jnp.float32) + b_ref[...]  # (TB, C_pad) f32
    logits_ref[...] = logits                              # lane-dense store

    # --- loss_fn(logits, labels): CrossEntropyLoss, per-example ------------
    # Re-read from VMEM so the full f32 tile isn't kept live across both the
    # store and the softmax (avoids vreg spills for large tiles).
    lg = logits_ref[...]
    # Padded logit columns carry bias = -1e30, so they never win the max and
    # contribute exp(-huge) == 0 to the sum-exp: no extra masking needed.
    m = jnp.max(lg, axis=-1, keepdims=True)               # (TB, 1)
    lse = m + jnp.log(jnp.sum(jnp.exp(lg - m), axis=-1, keepdims=True))
    labels = lab_ref[...]                                 # (TB, 1) int32
    class_iota = lax.broadcasted_iota(jnp.int32, lg.shape, 1)
    picked = jnp.sum(jnp.where(class_iota == labels, lg, 0.0),
                     axis=-1, keepdims=True)              # (TB, 1)
    loss_ref[...] = lse - picked                          # per-example loss


def hugmodel_forward(features, labels, w, b, *, block_b=256):
    """features: (B, D) f32, labels: (B,) int (must satisfy 0 <= label < C),
    w: (C, D) f32, b: (C,) f32.
    Returns {'logits': (B, C) f32, 'loss': () f32} (CE, mean over batch)."""
    B, D = features.shape
    C = w.shape[0]

    # Lane-dense class dim (128-aligned; this workload is mem-bound and C is
    # small, so we keep 128 rather than 256). Batch tile is a multiple of 8
    # for the f32 outputs; default 256 fills the v6e/v7x MXU rows.
    C_pad = _round_up(C, 128)
    TB = min(_round_up(block_b, 8), _round_up(B, 8))
    num_tiles = pl.cdiv(B, TB)           # partial last block handled by Pallas

    # Small, one-time parameter prep (weights are resident in VMEM).
    w_p = jnp.pad(w.astype(jnp.bfloat16), ((0, C_pad - C), (0, 0)))
    # Padded bias entries = -1e30 so padded logit columns vanish from the LSE.
    b_p = jnp.pad(b.astype(jnp.float32).reshape(1, C),
                  ((0, 0), (0, C_pad - C)), constant_values=-1e30)
    lab = labels.astype(jnp.int32).reshape(B, 1)

    cost = pl.CostEstimate(
        flops=2 * B * D * C_pad,
        transcendentals=B * C_pad,
        bytes_accessed=(B * D * 4            # features (f32 in)
                        + C_pad * D * 2      # weight (bf16)
                        + C_pad * 4          # bias
                        + B * 4              # labels
                        + B * C_pad * 4      # logits out
                        + B * 4))            # per-example loss out

    def build(single_buffer_params):
        # Constant-index (resident) operands don't need double-buffering.
        pm = ({"pipeline_mode": pl.Buffered(1)} if single_buffer_params else {})
        w_spec = pl.BlockSpec((C_pad, D), lambda i: (0, 0), **pm)
        b_spec = pl.BlockSpec((1, C_pad), lambda i: (0, 0), **pm)
        return pl.pallas_call(
            hugmodel_kernel,
            grid=(num_tiles,),
            in_specs=[
                pl.BlockSpec((TB, D), lambda i: (i, 0)),     # features tile (f32)
                w_spec,                                      # weight (resident)
                b_spec,                                      # bias (resident)
                pl.BlockSpec((TB, 1), lambda i: (i, 0)),     # labels tile
            ],
            out_specs=[
                pl.BlockSpec((TB, C_pad), lambda i: (i, 0)), # logits (lane-dense)
                pl.BlockSpec((TB, 1), lambda i: (i, 0)),     # per-example loss
            ],
            out_shape=[
                jax.ShapeDtypeStruct((B, C_pad), jnp.float32),
                jax.ShapeDtypeStruct((B, 1), jnp.float32),
            ],
            compiler_params=pltpu.CompilerParams(
                dimension_semantics=("parallel",),   # no cross-tile dependence
                vmem_limit_bytes=_vmem_limit_bytes()),
            cost_estimate=cost,
        )

    try:
        logits_pad, per_example = build(True)(features, w_p, b_p, lab)
    except Exception:
        # Older JAX without BlockSpec(pipeline_mode=...): default buffering.
        logits_pad, per_example = build(False)(features, w_p, b_p, lab)

    # No row slice needed (out_shape already uses the real B); only slice the
    # class dim when it actually had to be padded.
    logits = logits_pad if C_pad == C else logits_pad[:, :C]
    loss = jnp.sum(per_example) / B      # mean over batch (grid masks pad rows)
    return {"logits": logits, "loss": loss}


if __name__ == "__main__":
    # Small shapes consistent with a Linear-classifier net inside HugModel.
    # B is deliberately not a multiple of 8 to exercise the partial last block.
    B, D, C = 50, 32, 8

    key = jax.random.PRNGKey(0)
    k_feat, k_lab, k_w, k_b = jax.random.split(key, 4)

    features = jax.random.normal(k_feat, (B, D), dtype=jnp.float32)
    labels = jax.random.randint(k_lab, (B,), 0, C, dtype=jnp.int32)
    # Deterministic parameter init (mimics torch Linear kaiming-uniform scale).
    bound = 1.0 / (D ** 0.5)
    w = jax.random.uniform(k_w, (C, D), minval=-bound, maxval=bound,
                           dtype=jnp.float32)
    b = jax.random.uniform(k_b, (C,), minval=-bound, maxval=bound,
                           dtype=jnp.float32)

    out = hugmodel_forward(features, labels, w, b)
    jax.block_until_ready(out)

    # Pure-JAX reference with the same bf16-operand / f32-accumulate matmul.
    f_bf = features.astype(jnp.bfloat16).astype(jnp.float32)
    w_bf = w.astype(jnp.bfloat16).astype(jnp.float32)
    ref_logits = f_bf @ w_bf.T + b
    ref_lse = jax.nn.logsumexp(ref_logits, axis=-1)
    ref_loss = jnp.mean(ref_lse - ref_logits[jnp.arange(B), labels])

    assert out["logits"].shape == (B, C)
    assert jnp.allclose(out["logits"], ref_logits, atol=2e-4, rtol=2e-4)
    assert jnp.allclose(out["loss"], ref_loss, atol=2e-4, rtol=2e-4)

    print("KERNEL_OK")
</pallas_src>

<mosaic_0001>
module attributes {stable_mosaic.version = 11 : i64} {
  func.func @hugmodel_kernel(%arg0: i32, %arg1: memref<56x32xf32, #tpu.memory_space<vmem>>, %arg2: memref<128x32xbf16, #tpu.memory_space<vmem>>, %arg3: memref<1x128xf32, #tpu.memory_space<vmem>>, %arg4: memref<56x1xi32, #tpu.memory_space<vmem>>, %arg5: memref<56x128xf32, #tpu.memory_space<vmem>>, %arg6: memref<56x1xf32, #tpu.memory_space<vmem>>) attributes {dimension_semantics = [#tpu.dimension_semantics<parallel>], iteration_bounds = array<i64: 1>, scalar_prefetch = 0 : i64, scratch_operands = 0 : i64, tpu.core_type = #tpu.core_type<tc>, window_params = [{transform_indices = @transform_0, window_bounds = array<i64: 56, 32>}, {pipeline_mode = #tpu.pipeline_mode<synchronous>, transform_indices = @transform_1, window_bounds = array<i64: 128, 32>}, {pipeline_mode = #tpu.pipeline_mode<synchronous>, transform_indices = @transform_2, window_bounds = array<i64: 1, 128>}, {transform_indices = @transform_3, window_bounds = array<i64: 56, 1>}, {transform_indices = @transform_4, window_bounds = array<i64: 56, 128>}, {transform_indices = @transform_5, window_bounds = array<i64: 56, 1>}]} {
    %c0 = arith.constant 0 : index
    %c0_0 = arith.constant 0 : index
    %0 = vector.load %arg1[%c0, %c0_0] : memref<56x32xf32, #tpu.memory_space<vmem>>, vector<56x32xf32>
    %1 = arith.truncf %0 : vector<56x32xf32> to vector<56x32xbf16>
    %c0_1 = arith.constant 0 : index
    %c0_2 = arith.constant 0 : index
    %2 = vector.load %arg2[%c0_1, %c0_2] : memref<128x32xbf16, #tpu.memory_space<vmem>>, vector<128x32xbf16>
    %cst = arith.constant dense<0.000000e+00> : vector<56x128xf32>
    %3 = tpu.matmul %1, %2, %cst {dimension_numbers = #tpu.dot_dimension_numbers<[1], [1], [0], [0], [0, 0, 1, 0], [], []>} : vector<56x32xbf16>, vector<128x32xbf16>, vector<56x128xf32> -> vector<56x128xf32>
    %c0_3 = arith.constant 0 : index
    %c0_4 = arith.constant 0 : index
    %4 = vector.load %arg3[%c0_3, %c0_4] : memref<1x128xf32, #tpu.memory_space<vmem>>, vector<1x128xf32>
    %5 = vector.broadcast %4 : vector<1x128xf32> to vector<56x128xf32>
    %6 = arith.addf %3, %5 : vector<56x128xf32>
    %c0_5 = arith.constant 0 : index
    %c0_6 = arith.constant 0 : index
    %7 = vector.load %arg5[%c0_5, %c0_6] : memref<56x128xf32, #tpu.memory_space<vmem>>, vector<56x128xf32>
    tpu.vector_store %arg5[%c0_5, %c0_6], %6 {strides = array<i32>} : memref<56x128xf32, #tpu.memory_space<vmem>>, vector<56x128xf32>,
    %c0_7 = arith.constant 0 : index
    %c0_8 = arith.constant 0 : index
    %8 = vector.load %arg5[%c0_7, %c0_8] : memref<56x128xf32, #tpu.memory_space<vmem>>, vector<56x128xf32>
    %cst_9 = arith.constant dense<0xFF800000> : vector<56xf32>
    %9 = vector.multi_reduction <maximumf>, %8, %cst_9 [1] : vector<56x128xf32> to vector<56xf32>
    %10 = vector.shape_cast %9 : vector<56xf32> to vector<56x1xf32>
    %11 = vector.broadcast %10 : vector<56x1xf32> to vector<56x128xf32>
    %12 = arith.subf %8, %11 : vector<56x128xf32>
    %13 = math.exp %12 : vector<56x128xf32>
    %cst_10 = arith.constant dense<0.000000e+00> : vector<56xf32>
    %14 = vector.multi_reduction <add>, %13, %cst_10 [1] : vector<56x128xf32> to vector<56xf32>
    %15 = vector.shape_cast %14 : vector<56xf32> to vector<56x1xf32>
    %16 = math.log %15 : vector<56x1xf32>
    %17 = arith.addf %10, %16 : vector<56x1xf32>
    %c0_11 = arith.constant 0 : index
    %c0_12 = arith.constant 0 : index
    %18 = vector.load %arg4[%c0_11, %c0_12] : memref<56x1xi32, #tpu.memory_space<vmem>>, vector<56x1xi32>
    %19 = tpu.iota {dimensions = array<i32: 1>} : vector<56x128xi32>
    %20 = vector.broadcast %18 : vector<56x1xi32> to vector<56x128xi32>
    %21 = arith.cmpi eq, %19, %20 : vector<56x128xi32>
    %cst_13 = arith.constant 0.000000e+00 : f32
    %22 = vector.broadcast %cst_13 : f32 to vector<56x128xf32>
    %23 = arith.select %21, %8, %22 : vector<56x128xi1>, vector<56x128xf32>
    %cst_14 = arith.constant dense<0.000000e+00> : vector<56xf32>
    %24 = vector.multi_reduction <add>, %23, %cst_14 [1] : vector<56x128xf32> to vector<56xf32>
    %25 = vector.shape_cast %24 : vector<56xf32> to vector<56x1xf32>
    %26 = arith.subf %17, %25 : vector<56x1xf32>
    %c0_15 = arith.constant 0 : index
    %c0_16 = arith.constant 0 : index
    %27 = vector.load %arg6[%c0_15, %c0_16] : memref<56x1xf32, #tpu.memory_space<vmem>>, vector<56x1xf32>
    tpu.vector_store %arg6[%c0_15, %c0_16], %26 {strides = array<i32>} : memref<56x1xf32, #tpu.memory_space<vmem>>, vector<56x1xf32>,
    return
  }
  func.func @transform_0(%arg0: i32) -> (i32, i32) {
    %c0_i32 = arith.constant 0 : i32
    %c0_i32_0 = arith.constant 0 : i32
    return %arg0, %c0_i32 : i32, i32
  }
  func.func @transform_1(%arg0: i32) -> (i32, i32) {
    %c0_i32 = arith.constant 0 : i32
    %c0_i32_0 = arith.constant 0 : i32
    %c0_i32_1 = arith.constant 0 : i32
    return %c0_i32, %c0_i32_0 : i32, i32
  }
  func.func @transform_2(%arg0: i32) -> (i32, i32) {
    %c0_i32 = arith.constant 0 : i32
    %c0_i32_0 = arith.constant 0 : i32
    %c0_i32_1 = arith.constant 0 : i32
    return %c0_i32, %c0_i32_0 : i32, i32
  }
  func.func @transform_3(%arg0: i32) -> (i32, i32) {
    %c0_i32 = arith.constant 0 : i32
    %c0_i32_0 = arith.constant 0 : i32
    return %arg0, %c0_i32 : i32, i32
  }
  func.func @transform_4(%arg0: i32) -> (i32, i32) {
    %c0_i32 = arith.constant 0 : i32
    %c0_i32_0 = arith.constant 0 : i32
    return %arg0, %c0_i32 : i32, i32
  }
  func.func @transform_5(%arg0: i32) -> (i32, i32) {
    %c0_i32 = arith.constant 0 : i32
    %c0_i32_0 = arith.constant 0 : i32
    return %arg0, %c0_i32 : i32, i32
  }
}

module attributes {stable_mosaic.version = 11 : i64} {
  func.func @hugmodel_kernel(%arg0: i32, %arg1: memref<56x32xf32, #tpu.memory_space<vmem>>, %arg2: memref<128x32xbf16, #tpu.memory_space<vmem>>, %arg3: memref<1x128xf32, #tpu.memory_space<vmem>>, %arg4: memref<56x1xi32, #tpu.memory_space<vmem>>, %arg5: memref<56x128xf32, #tpu.memory_space<vmem>>, %arg6: memref<56x1xf32, #tpu.memory_space<vmem>>) attributes {dimension_semantics = [#tpu.dimension_semantics<parallel>], iteration_bounds = array<i64: 1>, scalar_prefetch = 0 : i64, scratch_operands = 0 : i64, tpu.core_type = #tpu.core_type<tc>, window_params = [{transform_indices = @transform_0, window_bounds = array<i64: 56, 32>}, {pipeline_mode = #tpu.pipeline_mode<synchronous>, transform_indices = @transform_1, window_bounds = array<i64: 128, 32>}, {pipeline_mode = #tpu.pipeline_mode<synchronous>, transform_indices = @transform_2, window_bounds = array<i64: 1, 128>}, {transform_indices = @transform_3, window_bounds = array<i64: 56, 1>}, {transform_indices = @transform_4, window_bounds = array<i64: 56, 128>}, {transform_indices = @transform_5, window_bounds = array<i64: 56, 1>}]} {
    %c0 = arith.constant 0 : index
    %c0_0 = arith.constant 0 : index
    %0 = vector.load %arg1[%c0, %c0_0] : memref<56x32xf32, #tpu.memory_space<vmem>>, vector<56x32xf32>
    %1 = arith.truncf %0 : vector<56x32xf32> to vector<56x32xbf16>
    %c0_1 = arith.constant 0 : index
    %c0_2 = arith.constant 0 : index
    %2 = vector.load %arg2[%c0_1, %c0_2] : memref<128x32xbf16, #tpu.memory_space<vmem>>, vector<128x32xbf16>
    %cst = arith.constant dense<0.000000e+00> : vector<56x128xf32>
    %3 = tpu.matmul %1, %2, %cst {dimension_numbers = #tpu.dot_dimension_numbers<[1], [1], [0], [0], [0, 0, 1, 0], [], []>} : vector<56x32xbf16>, vector<128x32xbf16>, vector<56x128xf32> -> vector<56x128xf32>
    %c0_3 = arith.constant 0 : index
    %c0_4 = arith.constant 0 : index
    %4 = vector.load %arg3[%c0_3, %c0_4] : memref<1x128xf32, #tpu.memory_space<vmem>>, vector<1x128xf32>
    %5 = vector.broadcast %4 : vector<1x128xf32> to vector<56x128xf32>
    %6 = arith.addf %3, %5 : vector<56x128xf32>
    %c0_5 = arith.constant 0 : index
    %c0_6 = arith.constant 0 : index
    %7 = vector.load %arg5[%c0_5, %c0_6] : memref<56x128xf32, #tpu.memory_space<vmem>>, vector<56x128xf32>
    tpu.vector_store %arg5[%c0_5, %c0_6], %6 {strides = array<i32>} : memref<56x128xf32, #tpu.memory_space<vmem>>, vector<56x128xf32>,
    %c0_7 = arith.constant 0 : index
    %c0_8 = arith.constant 0 : index
    %8 = vector.load %arg5[%c0_7, %c0_8] : memref<56x128xf32, #tpu.memory_space<vmem>>, vector<56x128xf32>
    %cst_9 = arith.constant dense<0xFF800000> : vector<56xf32>
    %9 = vector.multi_reduction <maximumf>, %8, %cst_9 [1] : vector<56x128xf32> to vector<56xf32>
    %10 = vector.shape_cast %9 : vector<56xf32> to vector<56x1xf32>
    %11 = vector.broadcast %10 : vector<56x1xf32> to vector<56x128xf32>
    %12 = arith.subf %8, %11 : vector<56x128xf32>
    %13 = math.exp %12 : vector<56x128xf32>
    %cst_10 = arith.constant dense<0.000000e+00> : vector<56xf32>
    %14 = vector.multi_reduction <add>, %13, %cst_10 [1] : vector<56x128xf32> to vector<56xf32>
    %15 = vector.shape_cast %14 : vector<56xf32> to vector<56x1xf32>
    %16 = math.log %15 : vector<56x1xf32>
    %17 = arith.addf %10, %16 : vector<56x1xf32>
    %c0_11 = arith.constant 0 : index
    %c0_12 = arith.constant 0 : index
    %18 = vector.load %arg4[%c0_11, %c0_12] : memref<56x1xi32, #tpu.memory_space<vmem>>, vector<56x1xi32>
    %19 = tpu.iota {dimensions = array<i32: 1>} : vector<56x128xi32>
    %20 = vector.broadcast %18 : vector<56x1xi32> to vector<56x128xi32>
    %21 = arith.cmpi eq, %19, %20 : vector<56x128xi32>
    %cst_13 = arith.constant 0.000000e+00 : f32
    %22 = vector.broadcast %cst_13 : f32 to vector<56x128xf32>
    %23 = arith.select %21, %8, %22 : vector<56x128xi1>, vector<56x128xf32>
    %cst_14 = arith.constant dense<0.000000e+00> : vector<56xf32>
    %24 = vector.multi_reduction <add>, %23, %cst_14 [1] : vector<56x128xf32> to vector<56xf32>
    %25 = vector.shape_cast %24 : vector<56xf32> to vector<56x1xf32>
    %26 = arith.subf %17, %25 : vector<56x1xf32>
    %c0_15 = arith.constant 0 : index
    %c0_16 = arith.constant 0 : index
    %27 = vector.load %arg6[%c0_15, %c0_16] : memref<56x1xf32, #tpu.memory_space<vmem>>, vector<56x1xf32>
    tpu.vector_store %arg6[%c0_15, %c0_16], %26 {strides = array<i32>} : memref<56x1xf32, #tpu.memory_space<vmem>>, vector<56x1xf32>,
    return
  }
  func.func @transform_0(%arg0: i32) -> (i32, i32) {
    %c0_i32 = arith.constant 0 : i32
    %c0_i32_0 = arith.constant 0 : i32
    return %arg0, %c0_i32 : i32, i32
  }
  func.func @transform_1(%arg0: i32) -> (i32, i32) {
    %c0_i32 = arith.constant 0 : i32
    %c0_i32_0 = arith.constant 0 : i32
    %c0_i32_1 = arith.constant 0 : i32
    return %c0_i32, %c0_i32_0 : i32, i32
  }
  func.func @transform_2(%arg0: i32) -> (i32, i32) {
    %c0_i32 = arith.constant 0 : i32
    %c0_i32_0 = arith.constant 0 : i32
    %c0_i32_1 = arith.constant 0 : i32
    return %c0_i32, %c0_i32_0 : i32, i32
  }
  func.func @transform_3(%arg0: i32) -> (i32, i32) {
    %c0_i32 = arith.constant 0 : i32
    %c0_i32_0 = arith.constant 0 : i32
    return %arg0, %c0_i32 : i32, i32
  }
  func.func @transform_4(%arg0: i32) -> (i32, i32) {
    %c0_i32 = arith.constant 0 : i32
    %c0_i32_0 = arith.constant 0 : i32
    return %arg0, %c0_i32 : i32, i32
  }
  func.func @transform_5(%arg0: i32) -> (i32, i32) {
    %c0_i32 = arith.constant 0 : i32
    %c0_i32_0 = arith.constant 0 : i32
    return %arg0, %c0_i32 : i32, i32
  }
}

</mosaic_0001>

<llo_original>
// kernel: tpu_custom_call.1
$region0: #{tpu_custom_call.1}
  #allocation0 [shape = 'u32[]', space=smem, size = 0x4, offset = 0x4, fixed_abs, tag = 'smem constant byte address 0x4 - core index']
  #allocation1 [shape = 'u32[144,128]{1,0:T(1,128)}', space=vmem, size = 0x12000, scoped, tag = 'internal scratch']
  %s0 = inlined_call_operand.hbm [shape: f32[50,32], index: 0, kind: input, shape index: {}]
  %s1 = inlined_call_operand.hbm [shape: bf16[128,32], index: 1, kind: input, shape index: {}]
  %s2 = inlined_call_operand.hbm [shape: f32[1,128], index: 2, kind: input, shape index: {}]
  %s3 = inlined_call_operand.hbm [shape: s32[50,1], index: 3, kind: input, shape index: {}]
  %s4 = inlined_call_operand.hbm [shape: f32[50,128], index: 4, kind: output, shape index: {0}]
  %s5 = inlined_call_operand.hbm [shape: f32[50,1], index: 5, kind: output, shape index: {1}]
  %6 = xla_tuple %s4, %s5
  %s7 = sld [smem:[#allocation0]]
  $region50: #{tpu_custom_call.1} parent=0
    _
  %s9 = ssub.s32 1, %s7
  %s10 = scalar_select 0, %s9, %s7
  $region1: #{tpu_custom_call.1} parent=0
    #allocation2 [shape = 'u8[28672]{0}', space=vmem, size = 0x7000, scoped, tag = 'input window, operand 0, single buffered']
    #allocation3 [shape = 's32[1]{0}', space=sflag, size = 0x4, scoped, tag = 'scoped memory for tpu_custom_call.1']
    #allocation4 [shape = 's32[1]{0}', space=sflag, size = 0x4, scoped, tag = 'scoped memory for tpu_custom_call.1']
    #allocation5 [shape = 'u8[32768]{0}', space=vmem, size = 0x8000, scoped, tag = 'input window, operand 1, single buffered']
    #allocation6 [shape = 's32[1]{0}', space=sflag, size = 0x4, scoped, tag = 'scoped memory for tpu_custom_call.1']
    #allocation7 [shape = 'u8[512]{0}', space=vmem, size = 0x400, scoped, tag = 'input window, operand 2, single buffered']
    #allocation8 [shape = 'u8[28672]{0}', space=vmem, size = 0x7000, scoped, tag = 'input window, operand 3, single buffered']
    #allocation9 [shape = 's32[1]{0}', space=sflag, size = 0x4, scoped, tag = 'scoped memory for tpu_custom_call.1']
    #allocation10 [shape = 'u8[28672]{0}', space=vmem, size = 0x7000, scoped, tag = 'output window, operand 0, single buffered']
    #allocation11 [shape = 'u8[28672]{0}', space=vmem, size = 0x7000, scoped, tag = 'output window, operand 1, single buffered']
    #allocation12 [shape = 's32[1]{0}', space=sflag, size = 0x4, scoped, tag = 'scoped memory for tpu_custom_call.1']
    %11 = vsyncpa [#allocation3], 0
    %12 = vsyncpa [#allocation6], 0
    %13 = vsyncpa [#allocation9], 0
    %14 = vsyncpa [#allocation4], 0
    %15 = vsyncpa [#allocation12], 0
    // Predicated region
    $region2: #{tpu_custom_call.1} parent=1 // pred_check
      _
    $region3: #{tpu_custom_call.1} parent=1 // pred_check_branch
      %17 = sbr.rel (0) target = $region5
    $region4: #{tpu_custom_call.1} parent=1 // pred_region
      %s19 = ssub.s32 896, 896
      %20 = vsyncadd [#allocation3], %s19
      %s21 = sshll.u32 [#allocation2], 4
      %s22 = int_to_ptr.vmem [resolvable:$true] %s21
      %27 = dma.hbm_to_vmem [thread:$0]  %s0, 896, %s22, [#allocation3], 128, 128, 8
    $region5: #{tpu_custom_call.1} parent=1 // pred_fallthru
      _
    // Predicated region
    $region6: #{tpu_custom_call.1} parent=1 // pred_check
      _
    $region7: #{tpu_custom_call.1} parent=1 // pred_check_branch
      %29 = sbr.rel (0) target = $region9
    $region8: #{tpu_custom_call.1} parent=1 // pred_region
      %s31 = ssub.s32 1024, 1024
      %32 = vsyncadd [#allocation6], %s31
      %s33 = sshll.u32 [#allocation5], 4
      %s34 = int_to_ptr.vmem [resolvable:$true] %s33
      %39 = dma.hbm_to_vmem [thread:$0]  %s1, 1024, %s34, [#allocation6], 64, 64, 4
    $region9: #{tpu_custom_call.1} parent=1 // pred_fallthru
      _
    // Predicated region
    $region10: #{tpu_custom_call.1} parent=1 // pred_check
      _
    $region11: #{tpu_custom_call.1} parent=1 // pred_check_branch
      %41 = sbr.rel (0) target = $region13
    $region12: #{tpu_custom_call.1} parent=1 // pred_region
      %s43 = ssub.s32 16, 16
      %44 = vsyncadd [#allocation6], %s43
      %s46 = sshll.u32 [#allocation7], 4
      %s47 = int_to_ptr.vmem [resolvable:$true] %s46
      %49 = dma.hbm_to_vmem [thread:$0]  %s2, 16, %s47, [#allocation6]
    $region13: #{tpu_custom_call.1} parent=1 // pred_fallthru
      _
    // Predicated region
    $region14: #{tpu_custom_call.1} parent=1 // pred_check
      _
    $region15: #{tpu_custom_call.1} parent=1 // pred_check_branch
      %51 = sbr.rel (0) target = $region17
    $region16: #{tpu_custom_call.1} parent=1 // pred_region
      %s53 = ssub.s32 896, 896
      %54 = vsyncadd [#allocation9], %s53
      %s55 = sshll.u32 [#allocation8], 4
      %s56 = int_to_ptr.vmem [resolvable:$true] %s55
      %61 = dma.hbm_to_vmem [thread:$0]  %s3, 896, %s56, [#allocation9], 128, 128, 8
    $region17: #{tpu_custom_call.1} parent=1 // pred_fallthru
      _
    // Predicated region
    $region18: #{tpu_custom_call.1} parent=1 // pred_check
      _
    $region19: #{tpu_custom_call.1} parent=1 // pred_check_branch
      %63 = sbr.rel (0) target = $region21
    $region20: #{tpu_custom_call.1} parent=1 // pred_region
      %64 = dma.done [#allocation3], 896
    $region21: #{tpu_custom_call.1} parent=1 // pred_fallthru
      _
    // Predicated region
    $region22: #{tpu_custom_call.1} parent=1 // pred_check
      _
    $region23: #{tpu_custom_call.1} parent=1 // pred_check_branch
      %66 = sbr.rel (0) target = $region25
    $region24: #{tpu_custom_call.1} parent=1 // pred_region
      %67 = dma.done [#allocation6], 1024
    $region25: #{tpu_custom_call.1} parent=1 // pred_fallthru
      _
    // Predicated region
    $region26: #{tpu_custom_call.1} parent=1 // pred_check
      _
    $region27: #{tpu_custom_call.1} parent=1 // pred_check_branch
      %69 = sbr.rel (0) target = $region29
    $region28: #{tpu_custom_call.1} parent=1 // pred_region
      %70 = dma.done [#allocation6], 16
    $region29: #{tpu_custom_call.1} parent=1 // pred_fallthru
      _
    // Predicated region
    $region30: #{tpu_custom_call.1} parent=1 // pred_check
      _
    $region31: #{tpu_custom_call.1} parent=1 // pred_check_branch
      %72 = sbr.rel (0) target = $region33
    $region32: #{tpu_custom_call.1} parent=1 // pred_region
      %73 = dma.done [#allocation9], 896
    $region33: #{tpu_custom_call.1} parent=1 // pred_fallthru
      _
    %v75 = vld [vmem:[#allocation2] sm:$0xff]
    %v76 = vld [vmem:[#allocation2 + $0x8] sm:$0xff]
    %v77 = vld [vmem:[#allocation2 + $0x10] sm:$0xff]
    %v78 = vld [vmem:[#allocation2 + $0x18] sm:$0xff]
    %v79 = vld [vmem:[#allocation2 + $0x20] sm:$0xff]
    %v80 = vld [vmem:[#allocation2 + $0x28] sm:$0xff]
    %v81 = vld [vmem:[#allocation2 + $0x30] sm:$0xff]
    %v82 = vpack.c.bf16 %v76, %v75
    %v83 = vpack.c.bf16 %v78, %v77
    %v84 = vpack.c.bf16 %v80, %v79
    %v85 = vpack.c.bf16 %v81, %v81
    %v86 = vld [vmem:[#allocation5] sm:$0xf]
    %v87 = vld [vmem:[#allocation5 + $0x4] sm:$0xf]
    %v88 = vld [vmem:[#allocation5 + $0x8] sm:$0xf]
    %v89 = vld [vmem:[#allocation5 + $0xc] sm:$0xf]
    %v90 = vld [vmem:[#allocation5 + $0x10] sm:$0xf]
    %v91 = vld [vmem:[#allocation5 + $0x14] sm:$0xf]
    %v92 = vld [vmem:[#allocation5 + $0x18] sm:$0xf]
    %v93 = vld [vmem:[#allocation5 + $0x1c] sm:$0xf]
    %v94 = vld [vmem:[#allocation5 + $0x20] sm:$0xf]
    %v95 = vld [vmem:[#allocation5 + $0x24] sm:$0xf]
    %v96 = vld [vmem:[#allocation5 + $0x28] sm:$0xf]
    %v97 = vld [vmem:[#allocation5 + $0x2c] sm:$0xf]
    %v98 = vld [vmem:[#allocation5 + $0x30] sm:$0xf]
    %v99 = vld [vmem:[#allocation5 + $0x34] sm:$0xf]
    %v100 = vld [vmem:[#allocation5 + $0x38] sm:$0xf]
    %v101 = vld [vmem:[#allocation5 + $0x3c] sm:$0xf]
    %v102 = vld [vmem:[#allocation7] sm:$0x1]
    %v104 = vlaneseq
    %v105 = vshrl.u32 %v104, 7
    %v106 = vsub.s32 0, %v105
    %v107 = vrot.slane %v102, %v106
    %v125 = vunpack.c.l.b16 %v86
    %v126 = vunpack.c.l.b16 %v87
    %v127 = vunpack.c.l.b16 %v88
    %v128 = vunpack.c.l.b16 %v89
    %v129 = vunpack.c.l.b16 %v90
    %v130 = vunpack.c.l.b16 %v91
    %v131 = vunpack.c.l.b16 %v92
    %v132 = vunpack.c.l.b16 %v93
    %v133 = vunpack.c.l.b16 %v94
    %v134 = vunpack.c.l.b16 %v95
    %v135 = vunpack.c.l.b16 %v96
    %v136 = vunpack.c.l.b16 %v97
    %v137 = vunpack.c.l.b16 %v98
    %v138 = vunpack.c.l.b16 %v99
    %v139 = vunpack.c.l.b16 %v100
    %v140 = vunpack.c.l.b16 %v101
    %v141 = vpack.c.b16 %v126, %v125
    %v142 = vpack.c.b16 %v128, %v127
    %v143 = vpack.c.b16 %v130, %v129
    %v144 = vpack.c.b16 %v132, %v131
    %v145 = vpack.c.b16 %v134, %v133
    %v146 = vpack.c.b16 %v136, %v135
    %v147 = vpack.c.b16 %v138, %v137
    %v148 = vpack.c.b16 %v140, %v139
    %vm149 = vcmask 261120
    %v151 = vsel %vm149, %v82, 0
    %v154 = vsel %vm149, %v83, 0
    %v157 = vsel %vm149, %v84, 0
    %v160 = vsel %vm149, %v85, 0
    %v163 = vsel %vm149, %v141, 0
    %v166 = vsel %vm149, %v142, 0
    %v169 = vsel %vm149, %v143, 0
    %v172 = vsel %vm149, %v144, 0
    %v175 = vsel %vm149, %v145, 0
    %v178 = vsel %vm149, %v146, 0
    %v181 = vsel %vm149, %v147, 0
    %v184 = vsel %vm149, %v148, 0
    %186 = vmatprep.subr.bf16.mxu0 0
    %187 = vmatpush1.bf16.xpose.msra.mxu0 %v163
    %188 = vmatprep.subr.bf16.mxu0 0
    %189 = vmatpush1.bf16.xpose.msra.mxu0 %v166
    %190 = vmatprep.subr.bf16.mxu0 0
    %191 = vmatpush1.bf16.xpose.msra.mxu0 %v169
    %192 = vmatprep.subr.bf16.mxu0 0
    %193 = vmatpush1.bf16.xpose.msra.mxu0 %v172
    %194 = vmatprep.subr.bf16.mxu0 0
    %195 = vmatpush1.bf16.xpose.msra.mxu0 %v175
    %196 = vmatprep.subr.bf16.mxu0 0
    %197 = vmatpush1.bf16.xpose.msra.mxu0 %v178
    %198 = vmatprep.subr.bf16.mxu0 0
    %199 = vmatpush1.bf16.xpose.msra.mxu0 %v181
    %200 = vmatprep.subr.bf16.mxu0 0
    %201 = vmatpush1.bf16.xpose.msra.mxu0 %v184
    %202 = vmatprep.subr.bf16.mxu0 0
    %203 = vmatpush1.bf16.xpose.msra.mxu0 0
    %204 = vmatprep.subr.bf16.mxu0 0
    %205 = vmatpush1.bf16.xpose.msra.mxu0 0
    %206 = vmatprep.subr.bf16.mxu0 0
    %207 = vmatpush1.bf16.xpose.msra.mxu0 0
    %208 = vmatprep.subr.bf16.mxu0 0
    %209 = vmatpush1.bf16.xpose.msra.mxu0 0
    %210 = vmatprep.subr.bf16.mxu0 0
    %211 = vmatpush1.bf16.xpose.msra.mxu0 0
    %212 = vmatprep.subr.bf16.mxu0 0
    %213 = vmatpush1.bf16.xpose.msra.mxu0 0
    %214 = vmatprep.subr.bf16.mxu0 0
    %215 = vmatpush1.bf16.xpose.msra.mxu0 0
    %216 = vmatprep.subr.bf16.mxu0 0
    %217 = vmatpush1.bf16.xpose.msra.mxu0 0
    %218 = vmatprep.mubr.bf16.mxu0 0
    %219 = vmatmul.mubr.bf16.gmra.mrb[0].mxu0 %v151
    %v220 = vpop.f32.mrb[0].mxu0
    %v221 = vadd.f32 %v107, %v220
    %v222 = vpop.f32.mrb[0].mxu0
    %v223 = vpop.f32.mrb[0].mxu0
    %v224 = vadd.f32 %v107, %v223
    %v225 = vpop.f32.mrb[0].mxu0
    %226 = vmatprep.mubr.bf16.mxu0 0
    %227 = vmatmul.mubr.bf16.gmra.mrb[0].mxu0 %v154
    %v228 = vpop.f32.mrb[0].mxu0
    %v229 = vadd.f32 %v107, %v228
    %v230 = vpop.f32.mrb[0].mxu0
    %v231 = vpop.f32.mrb[0].mxu0
    %v232 = vadd.f32 %v107, %v231
    %v233 = vpop.f32.mrb[0].mxu0
    %234 = vmatprep.mubr.bf16.mxu0 0
    %235 = vmatmul.mubr.bf16.gmra.mrb[0].mxu0 %v157
    %v236 = vpop.f32.mrb[0].mxu0
    %v237 = vadd.f32 %v107, %v236
    %v238 = vpop.f32.mrb[0].mxu0
    %v239 = vpop.f32.mrb[0].mxu0
    %v240 = vadd.f32 %v107, %v239
    %v241 = vpop.f32.mrb[0].mxu0
    %242 = vmatprep.mubr.bf16.mxu0 0
    %243 = vmatmul.mubr.bf16.gmra.mrb[0].mxu0 %v160
    %v244 = vpop.f32.mrb[0].mxu0
    %v245 = vadd.f32 %v107, %v244
    %v246 = vpop.f32.mrb[0].mxu0
    %v247 = vpop.f32.mrb[0].mxu0
    %v248 = vpop.f32.mrb[0].mxu0
    %249 = vdwg.mxu0
    %250 = vst [vmem:[#allocation10] sm:$0xff] %v221
    %251 = vst [vmem:[#allocation10 + $0x8] sm:$0xff] %v224
    %252 = vst [vmem:[#allocation10 + $0x10] sm:$0xff] %v229
    %253 = vst [vmem:[#allocation10 + $0x18] sm:$0xff] %v232
    %254 = vst [vmem:[#allocation10 + $0x20] sm:$0xff] %v237
    %255 = vst [vmem:[#allocation10 + $0x28] sm:$0xff] %v240
    %256 = vst [vmem:[#allocation10 + $0x30] sm:$0xff] %v245
    %v257 = vld [vmem:[#allocation10] sm:$0xff]
    %v258 = vld [vmem:[#allocation10 + $0x8] sm:$0xff]
    %v259 = vld [vmem:[#allocation10 + $0x10] sm:$0xff]
    %v260 = vld [vmem:[#allocation10 + $0x18] sm:$0xff]
    %v261 = vld [vmem:[#allocation10 + $0x20] sm:$0xff]
    %v262 = vld [vmem:[#allocation10 + $0x28] sm:$0xff]
    %v263 = vld [vmem:[#allocation10 + $0x30] sm:$0xff]
    %264 = vmax.xlane.f32.xlu0 %v257
    %v265 = vpop.xlane.xlu0 %264
    %266 = vmax.xlane.f32.xlu0 %v258
    %v267 = vpop.xlane.xlu0 %266
    %268 = vmax.xlane.f32.xlu0 %v259
    %v269 = vpop.xlane.xlu0 %268
    %270 = vmax.xlane.f32.xlu0 %v260
    %v271 = vpop.xlane.xlu0 %270
    %272 = vmax.xlane.f32.xlu0 %v261
    %v273 = vpop.xlane.xlu0 %272
    %274 = vmax.xlane.f32.xlu0 %v262
    %v275 = vpop.xlane.xlu0 %274
    %276 = vmax.xlane.f32.xlu0 %v263
    %v277 = vpop.xlane.xlu0 %276
    %v278 = vsub.f32 %v257, %v265
    %v279 = vsub.f32 %v258, %v267
    %v280 = vsub.f32 %v259, %v269
    %v281 = vsub.f32 %v260, %v271
    %v282 = vsub.f32 %v261, %v273
    %v283 = vsub.f32 %v262, %v275
    %v284 = vsub.f32 %v263, %v277
    %v285 = vmul.f32 %v278, 1.442695
    %v286 = vpow.pop %v285
    %v287 = vmul.f32 %v279, 1.442695
    %v288 = vpow.pop %v287
    %v289 = vmul.f32 %v280, 1.442695
    %v290 = vpow.pop %v289
    %v291 = vmul.f32 %v281, 1.442695
    %v292 = vpow.pop %v291
    %v293 = vmul.f32 %v282, 1.442695
    %v294 = vpow.pop %v293
    %v295 = vmul.f32 %v283, 1.442695
    %v296 = vpow.pop %v295
    %v297 = vmul.f32 %v284, 1.442695
    %v298 = vpow.pop %v297
    %299 = vadd.xlane.f32.xlu0 %v286
    %v300 = vpop.xlane.xlu0 %299
    %301 = vadd.xlane.f32.xlu0 %v288
    %v302 = vpop.xlane.xlu0 %301
    %303 = vadd.xlane.f32.xlu0 %v290
    %v304 = vpop.xlane.xlu0 %303
    %305 = vadd.xlane.f32.xlu0 %v292
    %v306 = vpop.xlane.xlu0 %305
    %307 = vadd.xlane.f32.xlu0 %v294
    %v308 = vpop.xlane.xlu0 %307
    %309 = vadd.xlane.f32.xlu0 %v296
    %v310 = vpop.xlane.xlu0 %309
    %311 = vadd.xlane.f32.xlu0 %v298
    %v312 = vpop.xlane.xlu0 %311
    %v313 = vlog2.pop %v300
    %v314 = vmul.f32 %v313, 0.6931472
    %v315 = vlog2.pop %v302
    %v316 = vmul.f32 %v315, 0.6931472
    %v317 = vlog2.pop %v304
    %v318 = vmul.f32 %v317, 0.6931472
    %v319 = vlog2.pop %v306
    %v320 = vmul.f32 %v319, 0.6931472
    %v321 = vlog2.pop %v308
    %v322 = vmul.f32 %v321, 0.6931472
    %v323 = vlog2.pop %v310
    %v324 = vmul.f32 %v323, 0.6931472
    %v325 = vlog2.pop %v312
    %v326 = vmul.f32 %v325, 0.6931472
    %v327 = vadd.f32 %v265, %v314
    %v328 = vadd.f32 %v267, %v316
    %v329 = vadd.f32 %v269, %v318
    %v330 = vadd.f32 %v271, %v320
    %v331 = vadd.f32 %v273, %v322
    %v332 = vadd.f32 %v275, %v324
    %v333 = vadd.f32 %v277, %v326
    %v334 = vld [vmem:[#allocation8] sm:$0xff]
    %v335 = vld [vmem:[#allocation8 + $0x8] sm:$0xff]
    %v336 = vld [vmem:[#allocation8 + $0x10] sm:$0xff]
    %v337 = vld [vmem:[#allocation8 + $0x18] sm:$0xff]
    %v338 = vld [vmem:[#allocation8 + $0x20] sm:$0xff]
    %v339 = vld [vmem:[#allocation8 + $0x28] sm:$0xff]
    %v340 = vld [vmem:[#allocation8 + $0x30] sm:$0xff]
    %v341 = vlaneseq
    %v342 = vand.u32 %v341, 127
    %343 = vset.pattern.permute.xlu0 0
    %344 = vperm.xlu0 %343, %v334
    %v345 = vpop.permute.xlu0 %344
    %346 = vset.pattern.permute.xlu0 0
    %347 = vperm.xlu0 %346, %v335
    %v348 = vpop.permute.xlu0 %347
    %349 = vset.pattern.permute.xlu0 0
    %350 = vperm.xlu0 %349, %v336
    %v351 = vpop.permute.xlu0 %350
    %352 = vset.pattern.permute.xlu0 0
    %353 = vperm.xlu0 %352, %v337
    %v354 = vpop.permute.xlu0 %353
    %355 = vset.pattern.permute.xlu0 0
    %356 = vperm.xlu0 %355, %v338
    %v357 = vpop.permute.xlu0 %356
    %358 = vset.pattern.permute.xlu0 0
    %359 = vperm.xlu0 %358, %v339
    %v360 = vpop.permute.xlu0 %359
    %361 = vset.pattern.permute.xlu0 0
    %362 = vperm.xlu0 %361, %v340
    %v363 = vpop.permute.xlu0 %362
    %vm364 = vcmp.eq.s32.totalorder %v342, %v345
    %vm365 = vcmp.eq.s32.totalorder %v342, %v348
    %vm366 = vcmp.eq.s32.totalorder %v342, %v351
    %vm367 = vcmp.eq.s32.totalorder %v342, %v354
    %vm368 = vcmp.eq.s32.totalorder %v342, %v357
    %vm369 = vcmp.eq.s32.totalorder %v342, %v360
    %vm370 = vcmp.eq.s32.totalorder %v342, %v363
    %v371 = vsel %vm364, %v257, 0.0
    %v372 = vsel %vm365, %v258, 0.0
    %v373 = vsel %vm366, %v259, 0.0
    %v374 = vsel %vm367, %v260, 0.0
    %v375 = vsel %vm368, %v261, 0.0
    %v376 = vsel %vm369, %v262, 0.0
    %v377 = vsel %vm370, %v263, 0.0
    %378 = vadd.xlane.f32.xlu0 %v371
    %v379 = vpop.xlane.xlu0 %378
    %380 = vadd.xlane.f32.xlu0 %v372
    %v381 = vpop.xlane.xlu0 %380
    %382 = vadd.xlane.f32.xlu0 %v373
    %v383 = vpop.xlane.xlu0 %382
    %384 = vadd.xlane.f32.xlu0 %v374
    %v385 = vpop.xlane.xlu0 %384
    %386 = vadd.xlane.f32.xlu0 %v375
    %v387 = vpop.xlane.xlu0 %386
    %388 = vadd.xlane.f32.xlu0 %v376
    %v389 = vpop.xlane.xlu0 %388
    %390 = vadd.xlane.f32.xlu0 %v377
    %v391 = vpop.xlane.xlu0 %390
    %v392 = vsub.f32 %v327, %v379
    %v393 = vsub.f32 %v328, %v381
    %v394 = vsub.f32 %v329, %v383
    %v395 = vsub.f32 %v330, %v385
    %v396 = vsub.f32 %v331, %v387
    %v397 = vsub.f32 %v332, %v389
    %v398 = vsub.f32 %v333, %v391
    %vm399 = vcmask 7168
    %400 = vst.msk [vmem:[#allocation11] sm:$0xff] %vm399, %v392
    %401 = vst.msk [vmem:[#allocation11 + $0x8] sm:$0xff] %vm399, %v393
    %402 = vst.msk [vmem:[#allocation11 + $0x10] sm:$0xff] %vm399, %v394
    %403 = vst.msk [vmem:[#allocation11 + $0x18] sm:$0xff] %vm399, %v395
    %404 = vst.msk [vmem:[#allocation11 + $0x20] sm:$0xff] %vm399, %v396
    %405 = vst.msk [vmem:[#allocation11 + $0x28] sm:$0xff] %vm399, %v397
    %406 = vst.msk [vmem:[#allocation11 + $0x30] sm:$0xff] %vm399, %v398
    // Predicated region
    $region34: #{tpu_custom_call.1} parent=1 // pred_check
      _
    $region35: #{tpu_custom_call.1} parent=1 // pred_check_branch
      %408 = sbr.rel (0) target = $region37
    $region36: #{tpu_custom_call.1} parent=1 // pred_region
      %s410 = ssub.s32 896, 896
      %411 = vsyncadd [#allocation4], %s410
      %s412 = sshll.u32 [#allocation10], 4
      %s413 = int_to_ptr.vmem [resolvable:$true] %s412
      %418 = dma.vmem_to_hbm [thread:$0]  %s413, 896, %s4, [#allocation4], 128, 128, 8
    $region37: #{tpu_custom_call.1} parent=1 // pred_fallthru
      _
    // Predicated region
    $region38: #{tpu_custom_call.1} parent=1 // pred_check
      _
    $region39: #{tpu_custom_call.1} parent=1 // pred_check_branch
      %420 = sbr.rel (0) target = $region41
    $region40: #{tpu_custom_call.1} parent=1 // pred_region
      %s422 = ssub.s32 896, 896
      %423 = vsyncadd [#allocation12], %s422
      %s424 = sshll.u32 [#allocation11], 4
      %s425 = int_to_ptr.vmem [resolvable:$true] %s424
      %430 = dma.vmem_to_hbm [thread:$0]  %s425, 896, %s5, [#allocation12], 128, 128, 8
    $region41: #{tpu_custom_call.1} parent=1 // pred_fallthru
      _
    // Predicated region
    $region42: #{tpu_custom_call.1} parent=1 // pred_check
      _
    $region43: #{tpu_custom_call.1} parent=1 // pred_check_branch
      %432 = sbr.rel (0) target = $region45
    $region44: #{tpu_custom_call.1} parent=1 // pred_region
      %433 = dma.done [#allocation4], 896
    $region45: #{tpu_custom_call.1} parent=1 // pred_fallthru
      _
    // Predicated region
    $region46: #{tpu_custom_call.1} parent=1 // pred_check
      _
    $region47: #{tpu_custom_call.1} parent=1 // pred_check_branch
      %435 = sbr.rel (0) target = $region49
    $region48: #{tpu_custom_call.1} parent=1 // pred_region
      %436 = dma.done [#allocation12], 896
    $region49: #{tpu_custom_call.1} parent=1 // pred_fallthru
      _
    %437 = vsyncpa [#allocation3], 1
    %438 = vsyncpa [#allocation6], 1
    %439 = vsyncpa [#allocation9], 1
    %440 = vsyncpa [#allocation4], 1
    %441 = vsyncpa [#allocation12], 1

// kernel: tpu_custom_call.1
$region0: #{tpu_custom_call.1}
  #allocation0 [shape = 'u32[]', space=smem, size = 0x4, offset = 0x4, fixed_abs, tag = 'smem constant byte address 0x4 - core index']
  #allocation1 [shape = 'u32[144,128]{1,0:T(1,128)}', space=vmem, size = 0x12000, scoped, tag = 'internal scratch']
  %s0 = inlined_call_operand.hbm [shape: f32[50,32], index: 0, kind: input, shape index: {}]
  %s1 = inlined_call_operand.hbm [shape: bf16[128,32], index: 1, kind: input, shape index: {}]
  %s2 = inlined_call_operand.hbm [shape: f32[1,128], index: 2, kind: input, shape index: {}]
  %s3 = inlined_call_operand.hbm [shape: s32[50,1], index: 3, kind: input, shape index: {}]
  %s4 = inlined_call_operand.hbm [shape: f32[50,128], index: 4, kind: output, shape index: {0}]
  %s5 = inlined_call_operand.hbm [shape: f32[50,1], index: 5, kind: output, shape index: {1}]
  %6 = xla_tuple %s4, %s5
  %s7 = sld [smem:[#allocation0]]
  $region50: #{tpu_custom_call.1} parent=0
    _
  %s9 = ssub.s32 1, %s7
  %s10 = scalar_select 0, %s9, %s7
  $region1: #{tpu_custom_call.1} parent=0
    #allocation2 [shape = 'u8[28672]{0}', space=vmem, size = 0x7000, scoped, tag = 'input window, operand 0, single buffered']
    #allocation3 [shape = 's32[1]{0}', space=sflag, size = 0x4, scoped, tag = 'scoped memory for tpu_custom_call.1']
    #allocation4 [shape = 's32[1]{0}', space=sflag, size = 0x4, scoped, tag = 'scoped memory for tpu_custom_call.1']
    #allocation5 [shape = 'u8[32768]{0}', space=vmem, size = 0x8000, scoped, tag = 'input window, operand 1, single buffered']
    #allocation6 [shape = 's32[1]{0}', space=sflag, size = 0x4, scoped, tag = 'scoped memory for tpu_custom_call.1']
    #allocation7 [shape = 'u8[512]{0}', space=vmem, size = 0x400, scoped, tag = 'input window, operand 2, single buffered']
    #allocation8 [shape = 'u8[28672]{0}', space=vmem, size = 0x7000, scoped, tag = 'input window, operand 3, single buffered']
    #allocation9 [shape = 's32[1]{0}', space=sflag, size = 0x4, scoped, tag = 'scoped memory for tpu_custom_call.1']
    #allocation10 [shape = 'u8[28672]{0}', space=vmem, size = 0x7000, scoped, tag = 'output window, operand 0, single buffered']
    #allocation11 [shape = 'u8[28672]{0}', space=vmem, size = 0x7000, scoped, tag = 'output window, operand 1, single buffered']
    #allocation12 [shape = 's32[1]{0}', space=sflag, size = 0x4, scoped, tag = 'scoped memory for tpu_custom_call.1']
    %11 = vsyncpa [#allocation3], 0
    %12 = vsyncpa [#allocation6], 0
    %13 = vsyncpa [#allocation9], 0
    %14 = vsyncpa [#allocation4], 0
    %15 = vsyncpa [#allocation12], 0
    // Predicated region
    $region2: #{tpu_custom_call.1} parent=1 // pred_check
      _
    $region3: #{tpu_custom_call.1} parent=1 // pred_check_branch
      %17 = sbr.rel (0) target = $region5
    $region4: #{tpu_custom_call.1} parent=1 // pred_region
      %s19 = ssub.s32 896, 896
      %20 = vsyncadd [#allocation3], %s19
      %s21 = sshll.u32 [#allocation2], 4
      %s22 = int_to_ptr.vmem [resolvable:$true] %s21
      %27 = dma.hbm_to_vmem [thread:$0]  %s0, 896, %s22, [#allocation3], 128, 128, 8
    $region5: #{tpu_custom_call.1} parent=1 // pred_fallthru
      _
    // Predicated region
    $region6: #{tpu_custom_call.1} parent=1 // pred_check
      _
    $region7: #{tpu_custom_call.1} parent=1 // pred_check_branch
      %29 = sbr.rel (0) target = $region9
    $region8: #{tpu_custom_call.1} parent=1 // pred_region
      %s31 = ssub.s32 1024, 1024
      %32 = vsyncadd [#allocation6], %s31
      %s33 = sshll.u32 [#allocation5], 4
      %s34 = int_to_ptr.vmem [resolvable:$true] %s33
      %39 = dma.hbm_to_vmem [thread:$0]  %s1, 1024, %s34, [#allocation6], 64, 64, 4
    $region9: #{tpu_custom_call.1} parent=1 // pred_fallthru
      _
    // Predicated region
    $region10: #{tpu_custom_call.1} parent=1 // pred_check
      _
    $region11: #{tpu_custom_call.1} parent=1 // pred_check_branch
      %41 = sbr.rel (0) target = $region13
    $region12: #{tpu_custom_call.1} parent=1 // pred_region
      %s43 = ssub.s32 16, 16
      %44 = vsyncadd [#allocation6], %s43
      %s46 = sshll.u32 [#allocation7], 4
      %s47 = int_to_ptr.vmem [resolvable:$true] %s46
      %49 = dma.hbm_to_vmem [thread:$0]  %s2, 16, %s47, [#allocation6]
    $region13: #{tpu_custom_call.1} parent=1 // pred_fallthru
      _
    // Predicated region
    $region14: #{tpu_custom_call.1} parent=1 // pred_check
      _
    $region15: #{tpu_custom_call.1} parent=1 // pred_check_branch
      %51 = sbr.rel (0) target = $region17
    $region16: #{tpu_custom_call.1} parent=1 // pred_region
      %s53 = ssub.s32 896, 896
      %54 = vsyncadd [#allocation9], %s53
      %s55 = sshll.u32 [#allocation8], 4
      %s56 = int_to_ptr.vmem [resolvable:$true] %s55
      %61 = dma.hbm_to_vmem [thread:$0]  %s3, 896, %s56, [#allocation9], 128, 128, 8
    $region17: #{tpu_custom_call.1} parent=1 // pred_fallthru
      _
    // Predicated region
    $region18: #{tpu_custom_call.1} parent=1 // pred_check
      _
    $region19: #{tpu_custom_call.1} parent=1 // pred_check_branch
      %63 = sbr.rel (0) target = $region21
    $region20: #{tpu_custom_call.1} parent=1 // pred_region
      %64 = dma.done [#allocation3], 896
    $region21: #{tpu_custom_call.1} parent=1 // pred_fallthru
      _
    // Predicated region
    $region22: #{tpu_custom_call.1} parent=1 // pred_check
      _
    $region23: #{tpu_custom_call.1} parent=1 // pred_check_branch
      %66 = sbr.rel (0) target = $region25
    $region24: #{tpu_custom_call.1} parent=1 // pred_region
      %67 = dma.done [#allocation6], 1024
    $region25: #{tpu_custom_call.1} parent=1 // pred_fallthru
      _
    // Predicated region
    $region26: #{tpu_custom_call.1} parent=1 // pred_check
      _
    $region27: #{tpu_custom_call.1} parent=1 // pred_check_branch
      %69 = sbr.rel (0) target = $region29
    $region28: #{tpu_custom_call.1} parent=1 // pred_region
      %70 = dma.done [#allocation6], 16
    $region29: #{tpu_custom_call.1} parent=1 // pred_fallthru
      _
    // Predicated region
    $region30: #{tpu_custom_call.1} parent=1 // pred_check
      _
    $region31: #{tpu_custom_call.1} parent=1 // pred_check_branch
      %72 = sbr.rel (0) target = $region33
    $region32: #{tpu_custom_call.1} parent=1 // pred_region
      %73 = dma.done [#allocation9], 896
    $region33: #{tpu_custom_call.1} parent=1 // pred_fallthru
      _
    %v75 = vld [vmem:[#allocation2] sm:$0xff]
    %v76 = vld [vmem:[#allocation2 + $0x8] sm:$0xff]
    %v77 = vld [vmem:[#allocation2 + $0x10] sm:$0xff]
    %v78 = vld [vmem:[#allocation2 + $0x18] sm:$0xff]
    %v79 = vld [vmem:[#allocation2 + $0x20] sm:$0xff]
    %v80 = vld [vmem:[#allocation2 + $0x28] sm:$0xff]
    %v81 = vld [vmem:[#allocation2 + $0x30] sm:$0xff]
    %v82 = vpack.c.bf16 %v76, %v75
    %v83 = vpack.c.bf16 %v78, %v77
    %v84 = vpack.c.bf16 %v80, %v79
    %v85 = vpack.c.bf16 %v81, %v81
    %v86 = vld [vmem:[#allocation5] sm:$0xf]
    %v87 = vld [vmem:[#allocation5 + $0x4] sm:$0xf]
    %v88 = vld [vmem:[#allocation5 + $0x8] sm:$0xf]
    %v89 = vld [vmem:[#allocation5 + $0xc] sm:$0xf]
    %v90 = vld [vmem:[#allocation5 + $0x10] sm:$0xf]
    %v91 = vld [vmem:[#allocation5 + $0x14] sm:$0xf]
    %v92 = vld [vmem:[#allocation5 + $0x18] sm:$0xf]
    %v93 = vld [vmem:[#allocation5 + $0x1c] sm:$0xf]
    %v94 = vld [vmem:[#allocation5 + $0x20] sm:$0xf]
    %v95 = vld [vmem:[#allocation5 + $0x24] sm:$0xf]
    %v96 = vld [vmem:[#allocation5 + $0x28] sm:$0xf]
    %v97 = vld [vmem:[#allocation5 + $0x2c] sm:$0xf]
    %v98 = vld [vmem:[#allocation5 + $0x30] sm:$0xf]
    %v99 = vld [vmem:[#allocation5 + $0x34] sm:$0xf]
    %v100 = vld [vmem:[#allocation5 + $0x38] sm:$0xf]
    %v101 = vld [vmem:[#allocation5 + $0x3c] sm:$0xf]
    %v102 = vld [vmem:[#allocation7] sm:$0x1]
    %v104 = vlaneseq
    %v105 = vshrl.u32 %v104, 7
    %v106 = vsub.s32 0, %v105
    %v107 = vrot.slane %v102, %v106
    %v125 = vunpack.c.l.b16 %v86
    %v126 = vunpack.c.l.b16 %v87
    %v127 = vunpack.c.l.b16 %v88
    %v128 = vunpack.c.l.b16 %v89
    %v129 = vunpack.c.l.b16 %v90
    %v130 = vunpack.c.l.b16 %v91
    %v131 = vunpack.c.l.b16 %v92
    %v132 = vunpack.c.l.b16 %v93
    %v133 = vunpack.c.l.b16 %v94
    %v134 = vunpack.c.l.b16 %v95
    %v135 = vunpack.c.l.b16 %v96
    %v136 = vunpack.c.l.b16 %v97
    %v137 = vunpack.c.l.b16 %v98
    %v138 = vunpack.c.l.b16 %v99
    %v139 = vunpack.c.l.b16 %v100
    %v140 = vunpack.c.l.b16 %v101
    %v141 = vpack.c.b16 %v126, %v125
    %v142 = vpack.c.b16 %v128, %v127
    %v143 = vpack.c.b16 %v130, %v129
    %v144 = vpack.c.b16 %v132, %v131
    %v145 = vpack.c.b16 %v134, %v133
    %v146 = vpack.c.b16 %v136, %v135
    %v147 = vpack.c.b16 %v138, %v137
    %v148 = vpack.c.b16 %v140, %v139
    %vm149 = vcmask 261120
    %v151 = vsel %vm149, %v82, 0
    %v154 = vsel %vm149, %v83, 0
    %v157 = vsel %vm149, %v84, 0
    %v160 = vsel %vm149, %v85, 0
    %v163 = vsel %vm149, %v141, 0
    %v166 = vsel %vm149, %v142, 0
    %v169 = vsel %vm149, %v143, 0
    %v172 = vsel %vm149, %v144, 0
    %v175 = vsel %vm149, %v145, 0
    %v178 = vsel %vm149, %v146, 0
    %v181 = vsel %vm149, %v147, 0
    %v184 = vsel %vm149, %v148, 0
    %186 = vmatprep.subr.bf16.mxu0 0
    %187 = vmatpush1.bf16.xpose.msra.mxu0 %v163
    %188 = vmatprep.subr.bf16.mxu0 0
    %189 = vmatpush1.bf16.xpose.msra.mxu0 %v166
    %190 = vmatprep.subr.bf16.mxu0 0
    %191 = vmatpush1.bf16.xpose.msra.mxu0 %v169
    %192 = vmatprep.subr.bf16.mxu0 0
    %193 = vmatpush1.bf16.xpose.msra.mxu0 %v172
    %194 = vmatprep.subr.bf16.mxu0 0
    %195 = vmatpush1.bf16.xpose.msra.mxu0 %v175
    %196 = vmatprep.subr.bf16.mxu0 0
    %197 = vmatpush1.bf16.xpose.msra.mxu0 %v178
    %198 = vmatprep.subr.bf16.mxu0 0
    %199 = vmatpush1.bf16.xpose.msra.mxu0 %v181
    %200 = vmatprep.subr.bf16.mxu0 0
    %201 = vmatpush1.bf16.xpose.msra.mxu0 %v184
    %202 = vmatprep.subr.bf16.mxu0 0
    %203 = vmatpush1.bf16.xpose.msra.mxu0 0
    %204 = vmatprep.subr.bf16.mxu0 0
    %205 = vmatpush1.bf16.xpose.msra.mxu0 0
    %206 = vmatprep.subr.bf16.mxu0 0
    %207 = vmatpush1.bf16.xpose.msra.mxu0 0
    %208 = vmatprep.subr.bf16.mxu0 0
    %209 = vmatpush1.bf16.xpose.msra.mxu0 0
    %210 = vmatprep.subr.bf16.mxu0 0
    %211 = vmatpush1.bf16.xpose.msra.mxu0 0
    %212 = vmatprep.subr.bf16.mxu0 0
    %213 = vmatpush1.bf16.xpose.msra.mxu0 0
    %214 = vmatprep.subr.bf16.mxu0 0
    %215 = vmatpush1.bf16.xpose.msra.mxu0 0
    %216 = vmatprep.subr.bf16.mxu0 0
    %217 = vmatpush1.bf16.xpose.msra.mxu0 0
    %218 = vmatprep.mubr.bf16.mxu0 0
    %219 = vmatmul.mubr.bf16.gmra.mrb[0].mxu0 %v151
    %v220 = vpop.f32.mrb[0].mxu0
    %v221 = vadd.f32 %v107, %v220
    %v222 = vpop.f32.mrb[0].mxu0
    %v223 = vpop.f32.mrb[0].mxu0
    %v224 = vadd.f32 %v107, %v223
    %v225 = vpop.f32.mrb[0].mxu0
    %226 = vmatprep.mubr.bf16.mxu0 0
    %227 = vmatmul.mubr.bf16.gmra.mrb[0].mxu0 %v154
    %v228 = vpop.f32.mrb[0].mxu0
    %v229 = vadd.f32 %v107, %v228
    %v230 = vpop.f32.mrb[0].mxu0
    %v231 = vpop.f32.mrb[0].mxu0
    %v232 = vadd.f32 %v107, %v231
    %v233 = vpop.f32.mrb[0].mxu0
    %234 = vmatprep.mubr.bf16.mxu0 0
    %235 = vmatmul.mubr.bf16.gmra.mrb[0].mxu0 %v157
    %v236 = vpop.f32.mrb[0].mxu0
    %v237 = vadd.f32 %v107, %v236
    %v238 = vpop.f32.mrb[0].mxu0
    %v239 = vpop.f32.mrb[0].mxu0
    %v240 = vadd.f32 %v107, %v239
    %v241 = vpop.f32.mrb[0].mxu0
    %242 = vmatprep.mubr.bf16.mxu0 0
    %243 = vmatmul.mubr.bf16.gmra.mrb[0].mxu0 %v160
    %v244 = vpop.f32.mrb[0].mxu0
    %v245 = vadd.f32 %v107, %v244
    %v246 = vpop.f32.mrb[0].mxu0
    %v247 = vpop.f32.mrb[0].mxu0
    %v248 = vpop.f32.mrb[0].mxu0
    %249 = vdwg.mxu0
    %250 = vst [vmem:[#allocation10] sm:$0xff] %v221
    %251 = vst [vmem:[#allocation10 + $0x8] sm:$0xff] %v224
    %252 = vst [vmem:[#allocation10 + $0x10] sm:$0xff] %v229
    %253 = vst [vmem:[#allocation10 + $0x18] sm:$0xff] %v232
    %254 = vst [vmem:[#allocation10 + $0x20] sm:$0xff] %v237
    %255 = vst [vmem:[#allocation10 + $0x28] sm:$0xff] %v240
    %256 = vst [vmem:[#allocation10 + $0x30] sm:$0xff] %v245
    %v257 = vld [vmem:[#allocation10] sm:$0xff]
    %v258 = vld [vmem:[#allocation10 + $0x8] sm:$0xff]
    %v259 = vld [vmem:[#allocation10 + $0x10] sm:$0xff]
    %v260 = vld [vmem:[#allocation10 + $0x18] sm:$0xff]
    %v261 = vld [vmem:[#allocation10 + $0x20] sm:$0xff]
    %v262 = vld [vmem:[#allocation10 + $0x28] sm:$0xff]
    %v263 = vld [vmem:[#allocation10 + $0x30] sm:$0xff]
    %264 = vmax.xlane.f32.xlu0 %v257
    %v265 = vpop.xlane.xlu0 %264
    %266 = vmax.xlane.f32.xlu0 %v258
    %v267 = vpop.xlane.xlu0 %266
    %268 = vmax.xlane.f32.xlu0 %v259
    %v269 = vpop.xlane.xlu0 %268
    %270 = vmax.xlane.f32.xlu0 %v260
    %v271 = vpop.xlane.xlu0 %270
    %272 = vmax.xlane.f32.xlu0 %v261
    %v273 = vpop.xlane.xlu0 %272
    %274 = vmax.xlane.f32.xlu0 %v262
    %v275 = vpop.xlane.xlu0 %274
    %276 = vmax.xlane.f32.xlu0 %v263
    %v277 = vpop.xlane.xlu0 %276
    %v278 = vsub.f32 %v257, %v265
    %v279 = vsub.f32 %v258, %v267
    %v280 = vsub.f32 %v259, %v269
    %v281 = vsub.f32 %v260, %v271
    %v282 = vsub.f32 %v261, %v273
    %v283 = vsub.f32 %v262, %v275
    %v284 = vsub.f32 %v263, %v277
    %v285 = vmul.f32 %v278, 1.442695
    %v286 = vpow.pop %v285
    %v287 = vmul.f32 %v279, 1.442695
    %v288 = vpow.pop %v287
    %v289 = vmul.f32 %v280, 1.442695
    %v290 = vpow.pop %v289
    %v291 = vmul.f32 %v281, 1.442695
    %v292 = vpow.pop %v291
    %v293 = vmul.f32 %v282, 1.442695
    %v294 = vpow.pop %v293
    %v295 = vmul.f32 %v283, 1.442695
    %v296 = vpow.pop %v295
    %v297 = vmul.f32 %v284, 1.442695
    %v298 = vpow.pop %v297
    %299 = vadd.xlane.f32.xlu0 %v286
    %v300 = vpop.xlane.xlu0 %299
    %301 = vadd.xlane.f32.xlu0 %v288
    %v302 = vpop.xlane.xlu0 %301
    %303 = vadd.xlane.f32.xlu0 %v290
    %v304 = vpop.xlane.xlu0 %303
    %305 = vadd.xlane.f32.xlu0 %v292
    %v306 = vpop.xlane.xlu0 %305
    %307 = vadd.xlane.f32.xlu0 %v294
    %v308 = vpop.xlane.xlu0 %307
    %309 = vadd.xlane.f32.xlu0 %v296
    %v310 = vpop.xlane.xlu0 %309
    %311 = vadd.xlane.f32.xlu0 %v298
    %v312 = vpop.xlane.xlu0 %311
    %v313 = vlog2.pop %v300
    %v314 = vmul.f32 %v313, 0.6931472
    %v315 = vlog2.pop %v302
    %v316 = vmul.f32 %v315, 0.6931472
    %v317 = vlog2.pop %v304
    %v318 = vmul.f32 %v317, 0.6931472
    %v319 = vlog2.pop %v306
    %v320 = vmul.f32 %v319, 0.6931472
    %v321 = vlog2.pop %v308
    %v322 = vmul.f32 %v321, 0.6931472
    %v323 = vlog2.pop %v310
    %v324 = vmul.f32 %v323, 0.6931472
    %v325 = vlog2.pop %v312
    %v326 = vmul.f32 %v325, 0.6931472
    %v327 = vadd.f32 %v265, %v314
    %v328 = vadd.f32 %v267, %v316
    %v329 = vadd.f32 %v269, %v318
    %v330 = vadd.f32 %v271, %v320
    %v331 = vadd.f32 %v273, %v322
    %v332 = vadd.f32 %v275, %v324
    %v333 = vadd.f32 %v277, %v326
    %v334 = vld [vmem:[#allocation8] sm:$0xff]
    %v335 = vld [vmem:[#allocation8 + $0x8] sm:$0xff]
    %v336 = vld [vmem:[#allocation8 + $0x10] sm:$0xff]
    %v337 = vld [vmem:[#allocation8 + $0x18] sm:$0xff]
    %v338 = vld [vmem:[#allocation8 + $0x20] sm:$0xff]
    %v339 = vld [vmem:[#allocation8 + $0x28] sm:$0xff]
    %v340 = vld [vmem:[#allocation8 + $0x30] sm:$0xff]
    %v341 = vlaneseq
    %v342 = vand.u32 %v341, 127
    %343 = vset.pattern.permute.xlu0 0
    %344 = vperm.xlu0 %343, %v334
    %v345 = vpop.permute.xlu0 %344
    %346 = vset.pattern.permute.xlu0 0
    %347 = vperm.xlu0 %346, %v335
    %v348 = vpop.permute.xlu0 %347
    %349 = vset.pattern.permute.xlu0 0
    %350 = vperm.xlu0 %349, %v336
    %v351 = vpop.permute.xlu0 %350
    %352 = vset.pattern.permute.xlu0 0
    %353 = vperm.xlu0 %352, %v337
    %v354 = vpop.permute.xlu0 %353
    %355 = vset.pattern.permute.xlu0 0
    %356 = vperm.xlu0 %355, %v338
    %v357 = vpop.permute.xlu0 %356
    %358 = vset.pattern.permute.xlu0 0
    %359 = vperm.xlu0 %358, %v339
    %v360 = vpop.permute.xlu0 %359
    %361 = vset.pattern.permute.xlu0 0
    %362 = vperm.xlu0 %361, %v340
    %v363 = vpop.permute.xlu0 %362
    %vm364 = vcmp.eq.s32.totalorder %v342, %v345
    %vm365 = vcmp.eq.s32.totalorder %v342, %v348
    %vm366 = vcmp.eq.s32.totalorder %v342, %v351
    %vm367 = vcmp.eq.s32.totalorder %v342, %v354
    %vm368 = vcmp.eq.s32.totalorder %v342, %v357
    %vm369 = vcmp.eq.s32.totalorder %v342, %v360
    %vm370 = vcmp.eq.s32.totalorder %v342, %v363
    %v371 = vsel %vm364, %v257, 0.0
    %v372 = vsel %vm365, %v258, 0.0
    %v373 = vsel %vm366, %v259, 0.0
    %v374 = vsel %vm367, %v260, 0.0
    %v375 = vsel %vm368, %v261, 0.0
    %v376 = vsel %vm369, %v262, 0.0
    %v377 = vsel %vm370, %v263, 0.0
    %378 = vadd.xlane.f32.xlu0 %v371
    %v379 = vpop.xlane.xlu0 %378
    %380 = vadd.xlane.f32.xlu0 %v372
    %v381 = vpop.xlane.xlu0 %380
    %382 = vadd.xlane.f32.xlu0 %v373
    %v383 = vpop.xlane.xlu0 %382
    %384 = vadd.xlane.f32.xlu0 %v374
    %v385 = vpop.xlane.xlu0 %384
    %386 = vadd.xlane.f32.xlu0 %v375
    %v387 = vpop.xlane.xlu0 %386
    %388 = vadd.xlane.f32.xlu0 %v376
    %v389 = vpop.xlane.xlu0 %388
    %390 = vadd.xlane.f32.xlu0 %v377
    %v391 = vpop.xlane.xlu0 %390
    %v392 = vsub.f32 %v327, %v379
    %v393 = vsub.f32 %v328, %v381
    %v394 = vsub.f32 %v329, %v383
    %v395 = vsub.f32 %v330, %v385
    %v396 = vsub.f32 %v331, %v387
    %v397 = vsub.f32 %v332, %v389
    %v398 = vsub.f32 %v333, %v391
    %vm399 = vcmask 7168
    %400 = vst.msk [vmem:[#allocation11] sm:$0xff] %vm399, %v392
    %401 = vst.msk [vmem:[#allocation11 + $0x8] sm:$0xff] %vm399, %v393
    %402 = vst.msk [vmem:[#allocation11 + $0x10] sm:$0xff] %vm399, %v394
    %403 = vst.msk [vmem:[#allocation11 + $0x18] sm:$0xff] %vm399, %v395
    %404 = vst.msk [vmem:[#allocation11 + $0x20] sm:$0xff] %vm399, %v396
    %405 = vst.msk [vmem:[#allocation11 + $0x28] sm:$0xff] %vm399, %v397
    %406 = vst.msk [vmem:[#allocation11 + $0x30] sm:$0xff] %vm399, %v398
    // Predicated region
    $region34: #{tpu_custom_call.1} parent=1 // pred_check
      _
    $region35: #{tpu_custom_call.1} parent=1 // pred_check_branch
      %408 = sbr.rel (0) target = $region37
    $region36: #{tpu_custom_call.1} parent=1 // pred_region
      %s410 = ssub.s32 896, 896
      %411 = vsyncadd [#allocation4], %s410
      %s412 = sshll.u32 [#allocation10], 4
      %s413 = int_to_ptr.vmem [resolvable:$true] %s412
      %418 = dma.vmem_to_hbm [thread:$0]  %s413, 896, %s4, [#allocation4], 128, 128, 8
    $region37: #{tpu_custom_call.1} parent=1 // pred_fallthru
      _
    // Predicated region
    $region38: #{tpu_custom_call.1} parent=1 // pred_check
      _
    $region39: #{tpu_custom_call.1} parent=1 // pred_check_branch
      %420 = sbr.rel (0) target = $region41
    $region40: #{tpu_custom_call.1} parent=1 // pred_region
      %s422 = ssub.s32 896, 896
      %423 = vsyncadd [#allocation12], %s422
      %s424 = sshll.u32 [#allocation11], 4
      %s425 = int_to_ptr.vmem [resolvable:$true] %s424
      %430 = dma.vmem_to_hbm [thread:$0]  %s425, 896, %s5, [#allocation12], 128, 128, 8
    $region41: #{tpu_custom_call.1} parent=1 // pred_fallthru
      _
    // Predicated region
    $region42: #{tpu_custom_call.1} parent=1 // pred_check
      _
    $region43: #{tpu_custom_call.1} parent=1 // pred_check_branch
      %432 = sbr.rel (0) target = $region45
    $region44: #{tpu_custom_call.1} parent=1 // pred_region
      %433 = dma.done [#allocation4], 896
    $region45: #{tpu_custom_call.1} parent=1 // pred_fallthru
      _
    // Predicated region
    $region46: #{tpu_custom_call.1} parent=1 // pred_check
      _
    $region47: #{tpu_custom_call.1} parent=1 // pred_check_branch
      %435 = sbr.rel (0) target = $region49
    $region48: #{tpu_custom_call.1} parent=1 // pred_region
      %436 = dma.done [#allocation12], 896
    $region49: #{tpu_custom_call.1} parent=1 // pred_fallthru
      _
    %437 = vsyncpa [#allocation3], 1
    %438 = vsyncpa [#allocation6], 1
    %439 = vsyncpa [#allocation9], 1
    %440 = vsyncpa [#allocation4], 1
    %441 = vsyncpa [#allocation12], 1

</llo_original>
